<compile_context>
chip_gen: v5e
topology: v5e:2x2
jax: 0.10.0
libtpu: 0.0.40
codegen_flags: <defaults>
</compile_context>

<pallas_src>
import numpy as np
import jax
import jax.numpy as jnp
from jax import lax
from jax.experimental import pallas as pl
from jax.experimental.pallas import tpu as pltpu

EPS = 1e-5
EXPANSION = 4
LANE = 128
VMEM_LIMIT = 48 * 1024 * 1024        # raise scoped-VMEM default; safe on v5e/v6e/v7x
ROW_TILE_BUDGET = 20 * 1024 * 1024   # live-tile budget (double-buffering counted)


def _rup(x, m):
    return (x + m - 1) // m * m


def _pick_row_tile(n_rows, bytes_per_row):
    """Largest multiple-of-8 divisor of n_rows whose double-buffered tile fits budget."""
    cap = min(512, n_rows, max(8, ROW_TILE_BUDGET // max(1, 2 * bytes_per_row)))
    cap -= cap % 8
    for cand in range(cap, 7, -8):
        if n_rows % cand == 0:
            return cand
    return n_rows


def _partial_stats_store(s_ref, y):
    """Write (sum, sum-of-squares) of y (rows, C) into a (1, 2, C) stats block."""
    s_ref[:, 0:1, :] = jnp.sum(y, axis=0, keepdims=True)[None]
    s_ref[:, 1:2, :] = jnp.sum(y * y, axis=0, keepdims=True)[None]


def _bn_affine(stats, gamma_p, beta_p, count):
    """Reduce per-tile (sum, sumsq) partials -> per-channel affine: bn(y) = y*a + b."""
    s = jnp.sum(stats.reshape(-1, 2, stats.shape[-1]), axis=0)
    mean = s[0] / count
    var = jnp.maximum(s[1] / count - mean * mean, 0.0)
    a = gamma_p * lax.rsqrt(var + EPS)
    b = beta_p - mean * a
    return a.reshape(1, -1), b.reshape(1, -1)


# --------------------------------------------------------------------------
# Stage 1: conv1 (1x1)  [+ projection-shortcut 1x1 conv when stride == 1]
# --------------------------------------------------------------------------
def _stage1_conv1(x3d, w1p, wscp, dt):
    N, HW, Cin_p = x3d.shape
    P_p = w1p.shape[1]
    with_sc = wscp is not None
    Cout_p = wscp.shape[1] if with_sc else 0
    esz = np.dtype(dt).itemsize
    T = _pick_row_tile(HW, (Cin_p + P_p + Cout_p) * esz)
    G = HW // T

    def kernel(x_ref, w1_ref, *rest):
        if with_sc:
            wsc_ref, y1_ref, s1_ref, ysc_ref, ssc_ref = rest
        else:
            y1_ref, s1_ref = rest
        x = x_ref[0]
        y1 = jnp.dot(x, w1_ref[...], preferred_element_type=jnp.float32)
        y1_ref[0] = y1.astype(dt)
        _partial_stats_store(s1_ref, y1)
        if with_sc:
            ysc = jnp.dot(x, wsc_ref[...], preferred_element_type=jnp.float32)
            ysc_ref[0] = ysc.astype(dt)
            _partial_stats_store(ssc_ref, ysc)

    in_specs = [pl.BlockSpec((1, T, Cin_p), lambda n, t: (n, t, 0)),
                pl.BlockSpec((Cin_p, P_p), lambda n, t: (0, 0))]
    inputs = [x3d, w1p]
    out_shape = [jax.ShapeDtypeStruct((N, HW, P_p), dt),
                 jax.ShapeDtypeStruct((N * G, 2, P_p), jnp.float32)]
    out_specs = [pl.BlockSpec((1, T, P_p), lambda n, t: (n, t, 0)),
                 pl.BlockSpec((1, 2, P_p), lambda n, t: (n * G + t, 0, 0))]
    if with_sc:
        in_specs.append(pl.BlockSpec((Cin_p, Cout_p), lambda n, t: (0, 0)))
        inputs.append(wscp)
        out_shape += [jax.ShapeDtypeStruct((N, HW, Cout_p), dt),
                      jax.ShapeDtypeStruct((N * G, 2, Cout_p), jnp.float32)]
        out_specs += [pl.BlockSpec((1, T, Cout_p), lambda n, t: (n, t, 0)),
                      pl.BlockSpec((1, 2, Cout_p), lambda n, t: (n * G + t, 0, 0))]

    outs = pl.pallas_call(
        kernel,
        grid=(N, G),
        in_specs=in_specs,
        out_specs=out_specs,
        out_shape=out_shape,
        compiler_params=pltpu.CompilerParams(
            dimension_semantics=("parallel", "parallel"),
            vmem_limit_bytes=VMEM_LIMIT),
    )(*inputs)
    if with_sc:
        return outs[0], outs[1], outs[2], outs[3]
    return outs[0], outs[1], None, None


# --------------------------------------------------------------------------
# Stage 2: bn1+relu -> zero-halo pad -> im2col -> single 3x3-conv matmul
#          [+ strided projection-shortcut 1x1 conv when stride > 1]
# --------------------------------------------------------------------------
def _stage2_conv2(y1, a1, b1, w2colp, x4d, wscp, stride, H, W, dt):
    # TODO(synk): for large H*W this per-image stage should be row-block tiled
    # with a 1-row halo instead of holding a full image in VMEM.
    N, HW, P_p = y1.shape
    Ho = (H - 1) // stride + 1
    Wo = (W - 1) // stride + 1
    HoWo = Ho * Wo
    with_sc = x4d is not None
    Cin_p = x4d.shape[-1] if with_sc else 0
    Cout_p = wscp.shape[1] if with_sc else 0
    taps = [(kh, kw) for kh in range(3) for kw in range(3)]

    def kernel(y1_ref, a1_ref, b1_ref, w2_ref, *rest):
        if with_sc:
            (x_ref, wsc_ref, y2_ref, s2_ref, ysc_ref, ssc_ref,
             pad_ref, tap_ref) = rest
        else:
            y2_ref, s2_ref, pad_ref, tap_ref = rest

        h1 = jnp.maximum(
            y1_ref[0].astype(jnp.float32) * a1_ref[...] + b1_ref[...], 0.0)
        h1 = h1.astype(dt).reshape(H, W, P_p)

        # Zero only the 1-pixel halo; the interior is fully overwritten below.
        zrow = jnp.zeros((1, W + 2, P_p), dt)
        zcol = jnp.zeros((H + 2, 1, P_p), dt)
        pad_ref[0:1, :, :] = zrow
        pad_ref[H + 1:H + 2, :, :] = zrow
        pad_ref[:, 0:1, :] = zcol
        pad_ref[:, W + 1:W + 2, :] = zcol
        pad_ref[1:H + 1, 1:W + 1, :] = h1

        # im2col: one (HoWo, 9*P_p) tap matrix, then a single MXU matmul.
        for j, (kh, kw) in enumerate(taps):
            if stride == 1:
                tap = pad_ref[kh:kh + Ho, kw:kw + Wo, :]
            else:
                # TODO(synk): sublane-strided read; a parity-split padded buffer
                # would keep stride>1 on the contiguous fast path.
                tap = pad_ref[pl.ds(kh, Ho, stride), pl.ds(kw, Wo, stride), :]
            tap_ref[:, j * P_p:(j + 1) * P_p] = tap.reshape(HoWo, P_p)

        y2 = jnp.dot(tap_ref[...], w2_ref[...], preferred_element_type=jnp.float32)
        y2_ref[0] = y2.astype(dt)
        _partial_stats_store(s2_ref, y2)

        if with_sc:
            xs = x_ref[0, pl.ds(0, Ho, stride), pl.ds(0, Wo, stride), :]
            ysc = jnp.dot(xs.reshape(HoWo, Cin_p), wsc_ref[...],
                          preferred_element_type=jnp.float32)
            ysc_ref[0] = ysc.astype(dt)
            _partial_stats_store(ssc_ref, ysc)

    in_specs = [pl.BlockSpec((1, HW, P_p), lambda n: (n, 0, 0)),
                pl.BlockSpec((1, P_p), lambda n: (0, 0)),
                pl.BlockSpec((1, P_p), lambda n: (0, 0)),
                pl.BlockSpec((9 * P_p, P_p), lambda n: (0, 0))]
    inputs = [y1, a1, b1, w2colp]
    out_shape = [jax.ShapeDtypeStruct((N, HoWo, P_p), dt),
                 jax.ShapeDtypeStruct((N, 2, P_p), jnp.float32)]
    out_specs = [pl.BlockSpec((1, HoWo, P_p), lambda n: (n, 0, 0)),
                 pl.BlockSpec((1, 2, P_p), lambda n: (n, 0, 0))]
    if with_sc:
        in_specs += [pl.BlockSpec((1, H, W, Cin_p), lambda n: (n, 0, 0, 0)),
                     pl.BlockSpec((Cin_p, Cout_p), lambda n: (0, 0))]
        inputs += [x4d, wscp]
        out_shape += [jax.ShapeDtypeStruct((N, HoWo, Cout_p), dt),
                      jax.ShapeDtypeStruct((N, 2, Cout_p), jnp.float32)]
        out_specs += [pl.BlockSpec((1, HoWo, Cout_p), lambda n: (n, 0, 0)),
                      pl.BlockSpec((1, 2, Cout_p), lambda n: (n, 0, 0))]

    outs = pl.pallas_call(
        kernel,
        grid=(N,),
        in_specs=in_specs,
        out_specs=out_specs,
        out_shape=out_shape,
        scratch_shapes=[pltpu.VMEM((H + 2, W + 2, P_p), dt),
                        pltpu.VMEM((HoWo, 9 * P_p), dt)],
        compiler_params=pltpu.CompilerParams(
            dimension_semantics=("parallel",),
            vmem_limit_bytes=VMEM_LIMIT),
    )(*inputs)
    if with_sc:
        return outs[0], outs[1], outs[2], outs[3]
    return outs[0], outs[1], None, None


# --------------------------------------------------------------------------
# Stage 3: bn2+relu -> conv3 (1x1)
# --------------------------------------------------------------------------
def _stage3_conv3(y2, a2, b2, w3p, dt):
    N, HoWo, P_p = y2.shape
    Cout_p = w3p.shape[1]
    esz = np.dtype(dt).itemsize
    T = _pick_row_tile(HoWo, (P_p + Cout_p) * esz)
    G = HoWo // T

    def kernel(y2_ref, a2_ref, b2_ref, w3_ref, y3_ref, s3_ref):
        h2 = jnp.maximum(
            y2_ref[0].astype(jnp.float32) * a2_ref[...] + b2_ref[...], 0.0)
        y3 = jnp.dot(h2.astype(dt), w3_ref[...], preferred_element_type=jnp.float32)
        y3_ref[0] = y3.astype(dt)
        _partial_stats_store(s3_ref, y3)

    y3, s3 = pl.pallas_call(
        kernel,
        grid=(N, G),
        in_specs=[pl.BlockSpec((1, T, P_p), lambda n, t: (n, t, 0)),
                  pl.BlockSpec((1, P_p), lambda n, t: (0, 0)),
                  pl.BlockSpec((1, P_p), lambda n, t: (0, 0)),
                  pl.BlockSpec((P_p, Cout_p), lambda n, t: (0, 0))],
        out_specs=[pl.BlockSpec((1, T, Cout_p), lambda n, t: (n, t, 0)),
                   pl.BlockSpec((1, 2, Cout_p), lambda n, t: (n * G + t, 0, 0))],
        out_shape=[jax.ShapeDtypeStruct((N, HoWo, Cout_p), dt),
                   jax.ShapeDtypeStruct((N * G, 2, Cout_p), jnp.float32)],
        compiler_params=pltpu.CompilerParams(
            dimension_semantics=("parallel", "parallel"),
            vmem_limit_bytes=VMEM_LIMIT),
    )(y2, a2, b2, w3p)
    return y3, s3


# --------------------------------------------------------------------------
# Stage 4: bn3 + shortcut (projected-BN affine or identity) + final relu
# --------------------------------------------------------------------------
def _stage4_add(y3, a3, b3, sc, asc, bsc, dt):
    N, HoWo, Cout_p = y3.shape
    esz = np.dtype(dt).itemsize
    T = _pick_row_tile(HoWo, 2 * Cout_p * esz + 4 * Cout_p)
    G = HoWo // T
    with_affine = asc is not None

    def kernel(y3_ref, a3_ref, b3_ref, sc_ref, *rest):
        if with_affine:
            asc_ref, bsc_ref, out_ref = rest
        else:
            (out_ref,) = rest
        h3 = y3_ref[0].astype(jnp.float32) * a3_ref[...] + b3_ref[...]
        s = sc_ref[0].astype(jnp.float32)
        if with_affine:
            s = s * asc_ref[...] + bsc_ref[...]
        out_ref[0] = jnp.maximum(h3 + s, 0.0)

    in_specs = [pl.BlockSpec((1, T, Cout_p), lambda n, t: (n, t, 0)),
                pl.BlockSpec((1, Cout_p), lambda n, t: (0, 0)),
                pl.BlockSpec((1, Cout_p), lambda n, t: (0, 0)),
                pl.BlockSpec((1, T, Cout_p), lambda n, t: (n, t, 0))]
    inputs = [y3, a3, b3, sc]
    if with_affine:
        in_specs += [pl.BlockSpec((1, Cout_p), lambda n, t: (0, 0)),
                     pl.BlockSpec((1, Cout_p), lambda n, t: (0, 0))]
        inputs += [asc, bsc]

    return pl.pallas_call(
        kernel,
        grid=(N, G),
        in_specs=in_specs,
        out_specs=pl.BlockSpec((1, T, Cout_p), lambda n, t: (n, t, 0)),
        out_shape=jax.ShapeDtypeStruct((N, HoWo, Cout_p), jnp.float32),
        compiler_params=pltpu.CompilerParams(
            dimension_semantics=("parallel", "parallel"),
            vmem_limit_bytes=VMEM_LIMIT),
    )(*inputs)


# --------------------------------------------------------------------------
# Wrapper
# --------------------------------------------------------------------------
def bottleneck_forward(x_nchw, params, stride, *, mxu_dtype=jnp.bfloat16):
    """Forward pass of the Bottleneck block (training-mode BatchNorm).

    Accepts / returns NCHW to match the PyTorch module.
    # TODO(synk): in a full network keep activations NHWC + channel-padded
    # end-to-end so the boundary transposes/pads are paid only once.
    """
    N, Cin, H, W = x_nchw.shape
    P = params["w1"].shape[1]
    Cout = EXPANSION * P
    has_proj = (stride != 1) or (Cin != Cout)
    Ho = (H - 1) // stride + 1
    Wo = (W - 1) // stride + 1
    dt = mxu_dtype

    Cin_p, P_p, Cout_p = _rup(Cin, LANE), _rup(P, LANE), _rup(Cout, LANE)

    x = jnp.transpose(x_nchw, (0, 2, 3, 1)).astype(jnp.float32)
    x4d = jnp.pad(x, ((0, 0), (0, 0), (0, 0), (0, Cin_p - Cin))).astype(dt)
    x3d = x4d.reshape(N, H * W, Cin_p)

    def padw(wm, r_p, c_p):
        r, c = wm.shape
        return jnp.pad(wm, ((0, r_p - r), (0, c_p - c))).astype(dt)

    def padv(v, c_p):
        v = v.reshape(-1).astype(jnp.float32)
        return jnp.pad(v, (0, c_p - v.shape[0]))

    w1p = padw(params["w1"], Cin_p, P_p)
    w3p = padw(params["w3"], P_p, Cout_p)
    w2p = jnp.pad(params["w2"], ((0, 0), (0, 0), (0, P_p - P), (0, P_p - P)))
    w2colp = w2p.reshape(9 * P_p, P_p).astype(dt)      # (kh, kw, cin)-major rows
    g1, be1 = padv(params["g1"], P_p), padv(params["b1"], P_p)
    g2, be2 = padv(params["g2"], P_p), padv(params["b2"], P_p)
    g3, be3 = padv(params["g3"], Cout_p), padv(params["b3"], Cout_p)
    wscp = padw(params["wsc"], Cin_p, Cout_p) if has_proj else None
    if has_proj:
        gsc, besc = padv(params["gsc"], Cout_p), padv(params["bsc"], Cout_p)

    # stage 1: conv1 (and projection shortcut when it is stride-1)
    y1, s1, ysc, ssc = _stage1_conv1(
        x3d, w1p, wscp if (has_proj and stride == 1) else None, dt)
    a1, c1 = _bn_affine(s1, g1, be1, N * H * W)

    # stage 2: bn1+relu -> im2col -> conv2 (and strided projection shortcut)
    y2, s2, ysc2, ssc2 = _stage2_conv2(
        y1, a1, c1, w2colp,
        x4d if (has_proj and stride != 1) else None,
        wscp if (has_proj and stride != 1) else None,
        stride, H, W, dt)
    if ysc2 is not None:
        ysc, ssc = ysc2, ssc2
    a2, c2 = _bn_affine(s2, g2, be2, N * Ho * Wo)

    # stage 3: bn2+relu -> conv3
    y3, s3 = _stage3_conv3(y2, a2, c2, w3p, dt)
    a3, c3 = _bn_affine(s3, g3, be3, N * Ho * Wo)

    # stage 4: bn3 + shortcut + relu
    if has_proj:
        asc, csc = _bn_affine(ssc, gsc, besc, N * Ho * Wo)
        out3d = _stage4_add(y3, a3, c3, ysc, asc, csc, dt)
    else:
        out3d = _stage4_add(y3, a3, c3, x3d, None, None, dt)

    out = out3d[:, :, :Cout].reshape(N, Ho, Wo, Cout)
    return jnp.transpose(out, (0, 3, 1, 2))


# ---------------- deterministic parameter init ----------------
def init_params(key, in_planes, planes, stride):
    cout = EXPANSION * planes
    ks = jax.random.split(key, 12)

    def w(k, shape, scale=0.1):
        return jax.random.normal(k, shape, jnp.float32) * scale

    def gamma(k, c):
        return jax.random.uniform(k, (c,), jnp.float32, 0.5, 1.5)

    def beta(k, c):
        return jax.random.normal(k, (c,), jnp.float32) * 0.1

    params = {
        "w1": w(ks[0], (in_planes, planes)),
        "g1": gamma(ks[1], planes), "b1": beta(ks[2], planes),
        "w2": w(ks[3], (3, 3, planes, planes)),
        "g2": gamma(ks[4], planes), "b2": beta(ks[5], planes),
        "w3": w(ks[6], (planes, cout)),
        "g3": gamma(ks[7], cout), "b3": beta(ks[8], cout),
    }
    if stride != 1 or in_planes != cout:
        params["wsc"] = w(ks[9], (in_planes, cout))
        params["gsc"] = gamma(ks[10], cout)
        params["bsc"] = beta(ks[11], cout)
    return params


# ---------------- pure-JAX reference (for verification) ----------------
def reference(x_nchw, params, stride):
    x = jnp.transpose(x_nchw, (0, 2, 3, 1)).astype(jnp.float32)
    Cin = x.shape[-1]
    P = params["w1"].shape[1]
    cout = EXPANSION * P

    def conv(h, w_hwio, s, pad):
        return lax.conv_general_dilated(
            h, w_hwio, (s, s), pad,
            dimension_numbers=("NHWC", "HWIO", "NHWC"),
            precision=lax.Precision.HIGHEST)

    def bn(y, g, b, relu=True):
        m = jnp.mean(y, axis=(0, 1, 2), keepdims=True)
        v = jnp.mean((y - m) ** 2, axis=(0, 1, 2), keepdims=True)
        o = (y - m) * (g.reshape(1, 1, 1, -1) * lax.rsqrt(v + EPS)) \
            + b.reshape(1, 1, 1, -1)
        return jnp.maximum(o, 0.0) if relu else o

    h = bn(conv(x, params["w1"].reshape(1, 1, Cin, P), 1, "VALID"),
           params["g1"], params["b1"])
    h = bn(conv(h, params["w2"], stride, ((1, 1), (1, 1))),
           params["g2"], params["b2"])
    h = bn(conv(h, params["w3"].reshape(1, 1, P, cout), 1, "VALID"),
           params["g3"], params["b3"], relu=False)
    if "wsc" in params:
        sc = bn(conv(x, params["wsc"].reshape(1, 1, Cin, cout), stride, "VALID"),
                params["gsc"], params["bsc"], relu=False)
    else:
        sc = x
    return jnp.transpose(jnp.maximum(h + sc, 0.0), (0, 3, 1, 2))


if __name__ == "__main__":
    key = jax.random.PRNGKey(0)
    kx, kp, kx2, kp2 = jax.random.split(key, 4)

    # Config A: projection shortcut (in_planes != expansion*planes), stride 1.
    N, in_planes, H, W = 2, 8, 16, 16
    planes, stride = 4, 1
    x = jax.random.normal(kx, (N, in_planes, H, W), jnp.float32)
    params = init_params(kp, in_planes, planes, stride)
    ref = jax.block_until_ready(reference(x, params, stride))

    # Exact-semantics check: f32 MXU operands.
    out_f32 = jax.block_until_ready(
        bottleneck_forward(x, params, stride, mxu_dtype=jnp.float32))
    np.testing.assert_allclose(np.asarray(out_f32), np.asarray(ref),
                               rtol=5e-3, atol=5e-3)

    # Performance configuration: bf16 MXU operands (f32 accumulation / BN math).
    # Looser tolerance only reflects bf16 operand quantization vs the f32 reference.
    out_bf16 = jax.block_until_ready(
        bottleneck_forward(x, params, stride, mxu_dtype=jnp.bfloat16))
    np.testing.assert_allclose(np.asarray(out_bf16), np.asarray(ref),
                               rtol=8e-2, atol=8e-2)

    # Config B: identity shortcut (in_planes == expansion*planes), stride 1.
    N2, in_planes2, planes2, stride2 = 2, 16, 4, 1
    x2 = jax.random.normal(kx2, (N2, in_planes2, H, W), jnp.float32)
    params2 = init_params(kp2, in_planes2, planes2, stride2)
    ref2 = jax.block_until_ready(reference(x2, params2, stride2))
    out2 = jax.block_until_ready(
        bottleneck_forward(x2, params2, stride2, mxu_dtype=jnp.float32))
    np.testing.assert_allclose(np.asarray(out2), np.asarray(ref2),
                               rtol=5e-3, atol=5e-3)

    print("KERNEL_OK")
</pallas_src>

<mosaic_0001>
module attributes {stable_mosaic.version = 11 : i64} {
  func.func @kernel(%arg0: i32, %arg1: i32, %arg2: memref<1x256x128xf32, #tpu.memory_space<vmem>>, %arg3: memref<128x128xf32, #tpu.memory_space<vmem>>, %arg4: memref<128x128xf32, #tpu.memory_space<vmem>>, %arg5: memref<1x256x128xf32, #tpu.memory_space<vmem>>, %arg6: memref<1x2x128xf32, #tpu.memory_space<vmem>>, %arg7: memref<1x256x128xf32, #tpu.memory_space<vmem>>, %arg8: memref<1x2x128xf32, #tpu.memory_space<vmem>>) attributes {dimension_semantics = [#tpu.dimension_semantics<parallel>, #tpu.dimension_semantics<parallel>], iteration_bounds = array<i64: 2, 1>, scalar_prefetch = 0 : i64, scratch_operands = 0 : i64, tpu.core_type = #tpu.core_type<tc>, window_params = [{transform_indices = @transform_0, window_bounds = array<i64: 1, 256, 128>}, {pipeline_mode = #tpu.pipeline_mode<synchronous>, transform_indices = @transform_1, window_bounds = array<i64: 128, 128>}, {pipeline_mode = #tpu.pipeline_mode<synchronous>, transform_indices = @transform_2, window_bounds = array<i64: 128, 128>}, {transform_indices = @transform_3, window_bounds = array<i64: 1, 256, 128>}, {transform_indices = @transform_4, window_bounds = array<i64: 1, 2, 128>}, {transform_indices = @transform_5, window_bounds = array<i64: 1, 256, 128>}, {transform_indices = @transform_6, window_bounds = array<i64: 1, 2, 128>}]} {
    %c0 = arith.constant 0 : index
    %c0_0 = arith.constant 0 : index
    %c0_1 = arith.constant 0 : index
    %0 = vector.load %arg2[%c0, %c0_0, %c0_1] : memref<1x256x128xf32, #tpu.memory_space<vmem>>, vector<1x256x128xf32>
    %1 = vector.shape_cast %0 : vector<1x256x128xf32> to vector<256x128xf32>
    %c0_2 = arith.constant 0 : index
    %c0_3 = arith.constant 0 : index
    %2 = vector.load %arg3[%c0_2, %c0_3] : memref<128x128xf32, #tpu.memory_space<vmem>>, vector<128x128xf32>
    %cst = arith.constant dense<0.000000e+00> : vector<256x128xf32>
    %3 = tpu.matmul %1, %2, %cst {dimension_numbers = #tpu.dot_dimension_numbers<[1], [0], [0], [1], [0, 0, 1, 1], [], []>} : vector<256x128xf32>, vector<128x128xf32>, vector<256x128xf32> -> vector<256x128xf32>
    %c0_4 = arith.constant 0 : index
    %c0_5 = arith.constant 0 : index
    %c0_6 = arith.constant 0 : index
    %4 = vector.load %arg5[%c0_4, %c0_5, %c0_6] : memref<1x256x128xf32, #tpu.memory_space<vmem>>, vector<1x256x128xf32>
    %5 = vector.shape_cast %4 : vector<1x256x128xf32> to vector<256x128xf32>
    %6 = vector.shape_cast %3 : vector<256x128xf32> to vector<1x256x128xf32>
    tpu.vector_store %arg5[%c0_4, %c0_5, %c0_6], %6 {strides = array<i32>} : memref<1x256x128xf32, #tpu.memory_space<vmem>>, vector<1x256x128xf32>,
    %cst_7 = arith.constant dense<0.000000e+00> : vector<128xf32>
    %7 = vector.multi_reduction <add>, %3, %cst_7 [0] : vector<256x128xf32> to vector<128xf32>
    %8 = vector.shape_cast %7 : vector<128xf32> to vector<1x128xf32>
    %9 = vector.shape_cast %8 : vector<1x128xf32> to vector<1x1x128xf32>
    %c0_8 = arith.constant 0 : index
    %c0_9 = arith.constant 0 : index
    %c0_10 = arith.constant 0 : index
    %10 = vector.load %arg6[%c0_8, %c0_9, %c0_10] : memref<1x2x128xf32, #tpu.memory_space<vmem>>, vector<1x1x128xf32>
    tpu.vector_store %arg6[%c0_8, %c0_9, %c0_10], %9 {strides = array<i32>} : memref<1x2x128xf32, #tpu.memory_space<vmem>>, vector<1x1x128xf32>,
    %11 = arith.mulf %3, %3 : vector<256x128xf32>
    %cst_11 = arith.constant dense<0.000000e+00> : vector<128xf32>
    %12 = vector.multi_reduction <add>, %11, %cst_11 [0] : vector<256x128xf32> to vector<128xf32>
    %13 = vector.shape_cast %12 : vector<128xf32> to vector<1x128xf32>
    %14 = vector.shape_cast %13 : vector<1x128xf32> to vector<1x1x128xf32>
    %c0_12 = arith.constant 0 : index
    %c1 = arith.constant 1 : index
    %c0_13 = arith.constant 0 : index
    %15 = vector.load %arg6[%c0_12, %c1, %c0_13] : memref<1x2x128xf32, #tpu.memory_space<vmem>>, vector<1x1x128xf32>
    tpu.vector_store %arg6[%c0_12, %c1, %c0_13], %14 {strides = array<i32>} : memref<1x2x128xf32, #tpu.memory_space<vmem>>, vector<1x1x128xf32>,
    %c0_14 = arith.constant 0 : index
    %c0_15 = arith.constant 0 : index
    %16 = vector.load %arg4[%c0_14, %c0_15] : memref<128x128xf32, #tpu.memory_space<vmem>>, vector<128x128xf32>
    %cst_16 = arith.constant dense<0.000000e+00> : vector<256x128xf32>
    %17 = tpu.matmul %1, %16, %cst_16 {dimension_numbers = #tpu.dot_dimension_numbers<[1], [0], [0], [1], [0, 0, 1, 1], [], []>} : vector<256x128xf32>, vector<128x128xf32>, vector<256x128xf32> -> vector<256x128xf32>
    %c0_17 = arith.constant 0 : index
    %c0_18 = arith.constant 0 : index
    %c0_19 = arith.constant 0 : index
    %18 = vector.load %arg7[%c0_17, %c0_18, %c0_19] : memref<1x256x128xf32, #tpu.memory_space<vmem>>, vector<1x256x128xf32>
    %19 = vector.shape_cast %18 : vector<1x256x128xf32> to vector<256x128xf32>
    %20 = vector.shape_cast %17 : vector<256x128xf32> to vector<1x256x128xf32>
    tpu.vector_store %arg7[%c0_17, %c0_18, %c0_19], %20 {strides = array<i32>} : memref<1x256x128xf32, #tpu.memory_space<vmem>>, vector<1x256x128xf32>,
    %cst_20 = arith.constant dense<0.000000e+00> : vector<128xf32>
    %21 = vector.multi_reduction <add>, %17, %cst_20 [0] : vector<256x128xf32> to vector<128xf32>
    %22 = vector.shape_cast %21 : vector<128xf32> to vector<1x128xf32>
    %23 = vector.shape_cast %22 : vector<1x128xf32> to vector<1x1x128xf32>
    %c0_21 = arith.constant 0 : index
    %c0_22 = arith.constant 0 : index
    %c0_23 = arith.constant 0 : index
    %24 = vector.load %arg8[%c0_21, %c0_22, %c0_23] : memref<1x2x128xf32, #tpu.memory_space<vmem>>, vector<1x1x128xf32>
    tpu.vector_store %arg8[%c0_21, %c0_22, %c0_23], %23 {strides = array<i32>} : memref<1x2x128xf32, #tpu.memory_space<vmem>>, vector<1x1x128xf32>,
    %25 = arith.mulf %17, %17 : vector<256x128xf32>
    %cst_24 = arith.constant dense<0.000000e+00> : vector<128xf32>
    %26 = vector.multi_reduction <add>, %25, %cst_24 [0] : vector<256x128xf32> to vector<128xf32>
    %27 = vector.shape_cast %26 : vector<128xf32> to vector<1x128xf32>
    %28 = vector.shape_cast %27 : vector<1x128xf32> to vector<1x1x128xf32>
    %c0_25 = arith.constant 0 : index
    %c1_26 = arith.constant 1 : index
    %c0_27 = arith.constant 0 : index
    %29 = vector.load %arg8[%c0_25, %c1_26, %c0_27] : memref<1x2x128xf32, #tpu.memory_space<vmem>>, vector<1x1x128xf32>
    tpu.vector_store %arg8[%c0_25, %c1_26, %c0_27], %28 {strides = array<i32>} : memref<1x2x128xf32, #tpu.memory_space<vmem>>, vector<1x1x128xf32>,
    return
  }
  func.func @transform_0(%arg0: i32, %arg1: i32) -> (i32, i32, i32) {
    %c0_i32 = arith.constant 0 : i32
    %c0_i32_0 = arith.constant 0 : i32
    return %arg0, %arg1, %c0_i32 : i32, i32, i32
  }
  func.func @transform_1(%arg0: i32, %arg1: i32) -> (i32, i32) {
    %c0_i32 = arith.constant 0 : i32
    %c0_i32_0 = arith.constant 0 : i32
    %c0_i32_1 = arith.constant 0 : i32
    return %c0_i32, %c0_i32_0 : i32, i32
  }
  func.func @transform_2(%arg0: i32, %arg1: i32) -> (i32, i32) {
    %c0_i32 = arith.constant 0 : i32
    %c0_i32_0 = arith.constant 0 : i32
    %c0_i32_1 = arith.constant 0 : i32
    return %c0_i32, %c0_i32_0 : i32, i32
  }
  func.func @transform_3(%arg0: i32, %arg1: i32) -> (i32, i32, i32) {
    %c0_i32 = arith.constant 0 : i32
    %c0_i32_0 = arith.constant 0 : i32
    return %arg0, %arg1, %c0_i32 : i32, i32, i32
  }
  func.func @transform_4(%arg0: i32, %arg1: i32) -> (i32, i32, i32) {
    %c1_i32 = arith.constant 1 : i32
    %0 = arith.muli %arg0, %c1_i32 : i32
    %1 = arith.addi %0, %arg1 : i32
    %c0_i32 = arith.constant 0 : i32
    %c0_i32_0 = arith.constant 0 : i32
    %c0_i32_1 = arith.constant 0 : i32
    return %1, %c0_i32, %c0_i32_0 : i32, i32, i32
  }
  func.func @transform_5(%arg0: i32, %arg1: i32) -> (i32, i32, i32) {
    %c0_i32 = arith.constant 0 : i32
    %c0_i32_0 = arith.constant 0 : i32
    return %arg0, %arg1, %c0_i32 : i32, i32, i32
  }
  func.func @transform_6(%arg0: i32, %arg1: i32) -> (i32, i32, i32) {
    %c1_i32 = arith.constant 1 : i32
    %0 = arith.muli %arg0, %c1_i32 : i32
    %1 = arith.addi %0, %arg1 : i32
    %c0_i32 = arith.constant 0 : i32
    %c0_i32_0 = arith.constant 0 : i32
    %c0_i32_1 = arith.constant 0 : i32
    return %1, %c0_i32, %c0_i32_0 : i32, i32, i32
  }
}

</mosaic_0001>

<llo_original>
// kernel: tpu_custom_call.1
$region0: #{tpu_custom_call.1}
  #allocation0 [shape = 'u32[]', space=smem, size = 0x4, offset = 0x4, fixed_abs, tag = 'smem constant byte address 0x4 - core index']
  #allocation1 [shape = 'u32[72,128]{1,0:T(1,128)}', space=vmem, size = 0x9000, scoped, tag = 'internal scratch']
  %s0 = inlined_call_operand.hbm [shape: f32[2,256,128], index: 0, kind: input, shape index: {}]
  %s1 = inlined_call_operand.hbm [shape: f32[128,128], index: 1, kind: input, shape index: {}]
  %s2 = inlined_call_operand.hbm [shape: f32[128,128], index: 2, kind: input, shape index: {}]
  %s3 = inlined_call_operand.hbm [shape: f32[2,256,128], index: 3, kind: output, shape index: {0}]
  %s4 = inlined_call_operand.hbm [shape: f32[2,2,128], index: 4, kind: output, shape index: {1}]
  %s5 = inlined_call_operand.hbm [shape: f32[2,256,128], index: 5, kind: output, shape index: {2}]
  %s6 = inlined_call_operand.hbm [shape: f32[2,2,128], index: 6, kind: output, shape index: {3}]
  %7 = xla_tuple %s3, %s4, %s5, %s6
  %s8 = sld [smem:[#allocation0]]
  $region81: #{tpu_custom_call.1} parent=0
    _
  %s10 = ssub.s32 1, %s8
  %s11 = scalar_select 0, %s10, %s8
  $region1: #{tpu_custom_call.1} parent=0
    #allocation2 [shape = 'u8[262144]{0}', space=vmem, size = 0x40000, scoped, tag = 'input window, operand 0']
    #allocation3 [shape = 's32[2]{0}', space=sflag, size = 0x8, scoped, tag = 'scoped memory for tpu_custom_call.1']
    #allocation4 [shape = 's32[2]{0}', space=sflag, size = 0x8, scoped, tag = 'scoped memory for tpu_custom_call.1']
    #allocation5 [shape = 'u8[65536]{0}', space=vmem, size = 0x10000, scoped, tag = 'input window, operand 1, single buffered']
    #allocation6 [shape = 's32[1]{0}', space=sflag, size = 0x4, scoped, tag = 'scoped memory for tpu_custom_call.1']
    #allocation7 [shape = 'u8[65536]{0}', space=vmem, size = 0x10000, scoped, tag = 'input window, operand 2, single buffered']
    #allocation8 [shape = 'u8[262144]{0}', space=vmem, size = 0x40000, scoped, tag = 'output window, operand 0']
    #allocation9 [shape = 'u8[2048]{0}', space=vmem, size = 0x800, scoped, tag = 'output window, operand 1']
    #allocation10 [shape = 's32[2]{0}', space=sflag, size = 0x8, scoped, tag = 'scoped memory for tpu_custom_call.1']
    #allocation11 [shape = 'u8[262144]{0}', space=vmem, size = 0x40000, scoped, tag = 'output window, operand 2']
    #allocation12 [shape = 'u8[2048]{0}', space=vmem, size = 0x800, scoped, tag = 'output window, operand 3']
    #allocation13 [shape = 's32[2]{0}', space=sflag, size = 0x8, scoped, tag = 'scoped memory for tpu_custom_call.1']
    %12 = vsyncpa [#allocation3], 0
    %s13 = scalar_lea.sflag [#allocation3], 1
    %14 = vsyncpa %s13, 0
    %15 = vsyncpa [#allocation6], 0
    %16 = vsyncpa [#allocation4], 0
    %s17 = scalar_lea.sflag [#allocation4], 1
    %18 = vsyncpa %s17, 0
    %19 = vsyncpa [#allocation10], 0
    %s20 = scalar_lea.sflag [#allocation10], 1
    %21 = vsyncpa %s20, 0
    %22 = vsyncpa [#allocation13], 0
    %s23 = scalar_lea.sflag [#allocation13], 1
    %24 = vsyncpa %s23, 0
    loop: start=0, step=1, limit=4
    $region2: #{tpu_custom_call.1} parent=1 // loop_pre_header
      _
    $region3: #{tpu_custom_call.1} parent=1 // loop_header
      %s26 = sphi 0, %s30
      %p27 = scmp.ge.s32.totalorder %s26, 4
      %s33 = sphi 0, %s45
      %s34 = sphi 0, %s41
      %s35 = sphi 0, %s33
      %s36 = sphi 0, %s34
      %s37 = sphi 0, %s35
      %s38 = sphi 0, %s36
      %s50 = sphi 0, %s52
      %s53 = sphi 0, %s50
      %s54 = sphi 0, %s53
      %s70 = sphi 0, %s54
      %s74 = sphi 0, %s74
      %s76 = sphi 0, %s74
      %s77 = sphi 0, %s76
      %s91 = sphi 0, %s77
      %s95 = sphi 0, %s95
      %s97 = sphi 0, %s95
      %s98 = sphi 0, %s97
      %s112 = sphi 0, %s98
      %s120 = sphi 0, %s122
      %s123 = sphi 0, %s120
      %s124 = sphi 0, %s123
      %s140 = sphi 0, %s124
      %s148 = sphi 0, %s150
      %s151 = sphi 0, %s148
      %s152 = sphi 0, %s151
      %s168 = sphi 0, %s152
      %s176 = sphi 0, %s178
      %s179 = sphi 0, %s176
      %s180 = sphi 0, %s179
      %s196 = sphi 0, %s180
      %s204 = sphi 0, %s206
      %s207 = sphi 0, %s204
      %s208 = sphi 0, %s207
      %s224 = sphi 0, %s208
    $region4: #{tpu_custom_call.1} parent=1 // loop_header_branch
      %29 = sbr.rel (%p27) target = $region8
    $region5: #{tpu_custom_call.1} parent=1 // loop_body
      %s31 = ssub.s32 %s26, 1
      %s32 = ssub.s32 %s26, 2
      %s39 = sadd.s32 1, %s34
      %p40 = scmp.ge.s32.totalorder %s39, 1
      %s41 = scalar_select %p40, 0, %s39
      %s42 = sadd.s32 1, %s33
      %s43 = scalar_select %p40, %s42, %s33
      %p44 = scmp.ge.s32.totalorder %s43, 2
      %s45 = scalar_select %p44, 0, %s43
      %s46 = ssub.s32 %s33, %s45
      %s47 = ssub.s32 %s34, %s41
      %s48 = sor.u32 %s46, %s47
      %p49 = scmp.eq.s32.totalorder %s48, 0
      %s51 = sadd.s32 %s50, 1
      %s52 = scalar_select %p49, %s50, %s51
      %p55 = pneg %p49
      %p56 = scmp.eq.s32.totalorder %s26, 1
      %p57 = por %p55, %p56
      %p58 = scmp.ne.s32.totalorder %s50, %s53
      %p59 = scmp.eq.s32.totalorder %s26, 0
      %p60 = por %p58, %p59
      %p61 = scmp.ne.s32.totalorder %s50, %s53
      %p62 = scmp.eq.s32.totalorder %s31, 1
      %p63 = por %p61, %p62
      %p64 = scmp.ne.s32.totalorder %s53, %s54
      %p65 = scmp.eq.s32.totalorder %s31, 0
      %p66 = por %p64, %p65
      %p67 = scmp.ne.s32.totalorder %s53, %s54
      %p68 = scmp.eq.s32.totalorder %s32, 1
      %p69 = por %p67, %p68
      %p71 = scmp.ne.s32.totalorder %s54, %s70
      %p72 = scmp.eq.s32.totalorder %s32, 0
      %p73 = por %p71, %p72
      %s75 = sadd.s32 %s74, 1
      %p78 = scmp.eq.s32.totalorder %s26, 1
      %p79 = scmp.ne.s32.totalorder %s74, %s76
      %p80 = scmp.eq.s32.totalorder %s26, 0
      %p81 = por %p79, %p80
      %p82 = scmp.ne.s32.totalorder %s74, %s76
      %p83 = scmp.eq.s32.totalorder %s31, 1
      %p84 = por %p82, %p83
      %p85 = scmp.ne.s32.totalorder %s76, %s77
      %p86 = scmp.eq.s32.totalorder %s31, 0
      %p87 = por %p85, %p86
      %p88 = scmp.ne.s32.totalorder %s76, %s77
      %p89 = scmp.eq.s32.totalorder %s32, 1
      %p90 = por %p88, %p89
      %p92 = scmp.ne.s32.totalorder %s77, %s91
      %p93 = scmp.eq.s32.totalorder %s32, 0
      %p94 = por %p92, %p93
      %s96 = sadd.s32 %s95, 1
      %p99 = scmp.eq.s32.totalorder %s26, 1
      %p100 = scmp.ne.s32.totalorder %s95, %s97
      %p101 = scmp.eq.s32.totalorder %s26, 0
      %p102 = por %p100, %p101
      %p103 = scmp.ne.s32.totalorder %s95, %s97
      %p104 = scmp.eq.s32.totalorder %s31, 1
      %p105 = por %p103, %p104
      %p106 = scmp.ne.s32.totalorder %s97, %s98
      %p107 = scmp.eq.s32.totalorder %s31, 0
      %p108 = por %p106, %p107
      %p109 = scmp.ne.s32.totalorder %s97, %s98
      %p110 = scmp.eq.s32.totalorder %s32, 1
      %p111 = por %p109, %p110
      %p113 = scmp.ne.s32.totalorder %s98, %s112
      %p114 = scmp.eq.s32.totalorder %s32, 0
      %p115 = por %p113, %p114
      %s116 = ssub.s32 %s33, %s45
      %s117 = ssub.s32 %s34, %s41
      %s118 = sor.u32 %s116, %s117
      %p119 = scmp.eq.s32.totalorder %s118, 0
      %s121 = sadd.s32 %s120, 1
      %s122 = scalar_select %p119, %s120, %s121
      %p125 = pneg %p119
      %p126 = scmp.eq.s32.totalorder %s26, 1
      %p127 = por %p125, %p126
      %p128 = scmp.ne.s32.totalorder %s120, %s123
      %p129 = scmp.eq.s32.totalorder %s26, 0
      %p130 = por %p128, %p129
      %p131 = scmp.ne.s32.totalorder %s120, %s123
      %p132 = scmp.eq.s32.totalorder %s31, 1
      %p133 = por %p131, %p132
      %p134 = scmp.ne.s32.totalorder %s123, %s124
      %p135 = scmp.eq.s32.totalorder %s31, 0
      %p136 = por %p134, %p135
      %p137 = scmp.ne.s32.totalorder %s123, %s124
      %p138 = scmp.eq.s32.totalorder %s32, 1
      %p139 = por %p137, %p138
      %p141 = scmp.ne.s32.totalorder %s124, %s140
      %p142 = scmp.eq.s32.totalorder %s32, 0
      %p143 = por %p141, %p142
      %s144 = sadd.s32 %s33, %s34
      %s145 = sadd.s32 %s45, %s41
      %s146 = ssub.s32 %s144, %s145
      %p147 = scmp.eq.s32.totalorder %s146, 0
      %s149 = sadd.s32 %s148, 1
      %s150 = scalar_select %p147, %s148, %s149
      %p153 = pneg %p147
      %p154 = scmp.eq.s32.totalorder %s26, 1
      %p155 = por %p153, %p154
      %p156 = scmp.ne.s32.totalorder %s148, %s151
      %p157 = scmp.eq.s32.totalorder %s26, 0
      %p158 = por %p156, %p157
      %p159 = scmp.ne.s32.totalorder %s148, %s151
      %p160 = scmp.eq.s32.totalorder %s31, 1
      %p161 = por %p159, %p160
      %p162 = scmp.ne.s32.totalorder %s151, %s152
      %p163 = scmp.eq.s32.totalorder %s31, 0
      %p164 = por %p162, %p163
      %p165 = scmp.ne.s32.totalorder %s151, %s152
      %p166 = scmp.eq.s32.totalorder %s32, 1
      %p167 = por %p165, %p166
      %p169 = scmp.ne.s32.totalorder %s152, %s168
      %p170 = scmp.eq.s32.totalorder %s32, 0
      %p171 = por %p169, %p170
      %s172 = ssub.s32 %s33, %s45
      %s173 = ssub.s32 %s34, %s41
      %s174 = sor.u32 %s172, %s173
      %p175 = scmp.eq.s32.totalorder %s174, 0
      %s177 = sadd.s32 %s176, 1
      %s178 = scalar_select %p175, %s176, %s177
      %p181 = pneg %p175
      %p182 = scmp.eq.s32.totalorder %s26, 1
      %p183 = por %p181, %p182
      %p184 = scmp.ne.s32.totalorder %s176, %s179
      %p185 = scmp.eq.s32.totalorder %s26, 0
      %p186 = por %p184, %p185
      %p187 = scmp.ne.s32.totalorder %s176, %s179
      %p188 = scmp.eq.s32.totalorder %s31, 1
      %p189 = por %p187, %p188
      %p190 = scmp.ne.s32.totalorder %s179, %s180
      %p191 = scmp.eq.s32.totalorder %s31, 0
      %p192 = por %p190, %p191
      %p193 = scmp.ne.s32.totalorder %s179, %s180
      %p194 = scmp.eq.s32.totalorder %s32, 1
      %p195 = por %p193, %p194
      %p197 = scmp.ne.s32.totalorder %s180, %s196
      %p198 = scmp.eq.s32.totalorder %s32, 0
      %p199 = por %p197, %p198
      %s200 = sadd.s32 %s33, %s34
      %s201 = sadd.s32 %s45, %s41
      %s202 = ssub.s32 %s200, %s201
      %p203 = scmp.eq.s32.totalorder %s202, 0
      %s205 = sadd.s32 %s204, 1
      %s206 = scalar_select %p203, %s204, %s205
      %p209 = pneg %p203
      %p210 = scmp.eq.s32.totalorder %s26, 1
      %p211 = por %p209, %p210
      %p212 = scmp.ne.s32.totalorder %s204, %s207
      %p213 = scmp.eq.s32.totalorder %s26, 0
      %p214 = por %p212, %p213
      %p215 = scmp.ne.s32.totalorder %s204, %s207
      %p216 = scmp.eq.s32.totalorder %s31, 1
      %p217 = por %p215, %p216
      %p218 = scmp.ne.s32.totalorder %s207, %s208
      %p219 = scmp.eq.s32.totalorder %s31, 0
      %p220 = por %p218, %p219
      %p221 = scmp.ne.s32.totalorder %s207, %s208
      %p222 = scmp.eq.s32.totalorder %s32, 1
      %p223 = por %p221, %p222
      %p225 = scmp.ne.s32.totalorder %s208, %s224
      %p226 = scmp.eq.s32.totalorder %s32, 0
      %p227 = por %p225, %p226
      %p228 = scmp.le.s32.totalorder 1, %s26
      %p229 = scmp.lt.s32.totalorder %s26, 3
      %p230 = pnand %p228, %p229
      %p231 = pneg %p230
      // Predicated region
      $region9: #{tpu_custom_call.1} parent=5 // pred_check
        _
      $region10: #{tpu_custom_call.1} parent=5 // pred_check_branch
        %233 = sbr.rel (%p230) target = $region12
      $region11: #{tpu_custom_call.1} parent=5 // pred_region
        %s234 = ssub.s32 %s26, 1
        // Predicated region
        $region13: #{tpu_custom_call.1} parent=11 // pred_check
          %p235 = pneg %p87
        $region14: #{tpu_custom_call.1} parent=11 // pred_check_branch
          %237 = sbr.rel (%p235) target = $region16
        $region15: #{tpu_custom_call.1} parent=11 // pred_region
          %239 = vsyncadd [#allocation6], 0
          %s240 = sshll.u32 %s1, 4
          %s241 = int_to_ptr.hbm [resolvable:$true] %s240
          %s242 = sshll.u32 [#allocation5], 4
          %s243 = int_to_ptr.vmem [resolvable:$true] %s242
          %248 = dma.hbm_to_vmem [thread:$0]  %s241, 2048, %s243, [#allocation6], 128, 128, 8
        $region16: #{tpu_custom_call.1} parent=11 // pred_fallthru
          _
        // Predicated region
        $region17: #{tpu_custom_call.1} parent=11 // pred_check
          %p249 = pneg %p108
        $region18: #{tpu_custom_call.1} parent=11 // pred_check_branch
          %251 = sbr.rel (%p249) target = $region20
        $region19: #{tpu_custom_call.1} parent=11 // pred_region
          %253 = vsyncadd [#allocation6], 0
          %s254 = sshll.u32 %s2, 4
          %s255 = int_to_ptr.hbm [resolvable:$true] %s254
          %s256 = sshll.u32 [#allocation7], 4
          %s257 = int_to_ptr.vmem [resolvable:$true] %s256
          %262 = dma.hbm_to_vmem [thread:$0]  %s255, 2048, %s257, [#allocation6], 128, 128, 8
        $region20: #{tpu_custom_call.1} parent=11 // pred_fallthru
          _
      $region12: #{tpu_custom_call.1} parent=5 // pred_fallthru
        _
      %p263 = scmp.lt.s32.totalorder %s26, 2
      // Predicated region
      $region21: #{tpu_custom_call.1} parent=5 // pred_check
        %p264 = pneg %p263
      $region22: #{tpu_custom_call.1} parent=5 // pred_check_branch
        %266 = sbr.rel (%p264) target = $region24
      $region23: #{tpu_custom_call.1} parent=5 // pred_region
        // Predicated region
        $region25: #{tpu_custom_call.1} parent=23 // pred_check
          %p267 = pneg %p60
        $region26: #{tpu_custom_call.1} parent=23 // pred_check_branch
          %269 = sbr.rel (%p267) target = $region28
        $region27: #{tpu_custom_call.1} parent=23 // pred_region
          %s270 = sand.u32 %s50, 1
          %s271 = scalar_lea.sflag [#allocation3], %s270
          %s272 = sand.u32 %s50, 1
          %s273 = smul.addr %s272, 256
          %s274 = scalar_lea.vmem [#allocation2], %s273
          %s275 = smul.u32 32, %s34
          %277 = vsyncadd %s271, 0
          %s278 = smul.addr %s33, 32
          %s279 = sadd.s32 %s275, %s278
          %s280 = smul.addr %s279, 8
          %s281 = scalar_lea.hbm %s0, %s280
          %s282 = sshll.u32 %s281, 4
          %s283 = int_to_ptr.hbm [resolvable:$true] %s282
          %s284 = sshll.u32 %s274, 4
          %s285 = int_to_ptr.vmem [resolvable:$true] %s284
          %290 = dma.hbm_to_vmem [thread:$0]  %s283, 4096, %s285, %s271, 128, 128, 8
        $region28: #{tpu_custom_call.1} parent=23 // pred_fallthru
          _
      $region24: #{tpu_custom_call.1} parent=5 // pred_fallthru
        _
      %p291 = scmp.le.s32.totalorder 1, %s26
      %p292 = scmp.lt.s32.totalorder %s26, 3
      %p293 = pnand %p291, %p292
      %p294 = pneg %p293
      // Predicated region
      $region29: #{tpu_custom_call.1} parent=5 // pred_check
        _
      $region30: #{tpu_custom_call.1} parent=5 // pred_check_branch
        %296 = sbr.rel (%p293) target = $region32
      $region31: #{tpu_custom_call.1} parent=5 // pred_region
        %s297 = ssub.s32 %s26, 1
        %s298 = sand.u32 %s53, 1
        %s299 = scalar_lea.sflag [#allocation3], %s298
        %s300 = sand.u32 %s53, 1
        %s301 = smul.addr %s300, 256
        %s302 = scalar_lea.vmem [#allocation2], %s301
        // Predicated region
        $region33: #{tpu_custom_call.1} parent=31 // pred_check
          %p303 = pneg %p66
        $region34: #{tpu_custom_call.1} parent=31 // pred_check_branch
          %305 = sbr.rel (%p303) target = $region36
        $region35: #{tpu_custom_call.1} parent=31 // pred_region
          %307 = dma.done %s299, 4096
        $region36: #{tpu_custom_call.1} parent=31 // pred_fallthru
          _
        // Predicated region
        $region37: #{tpu_custom_call.1} parent=31 // pred_check
          %p308 = pneg %p87
        $region38: #{tpu_custom_call.1} parent=31 // pred_check_branch
          %310 = sbr.rel (%p308) target = $region40
        $region39: #{tpu_custom_call.1} parent=31 // pred_region
          %312 = dma.done [#allocation6], 2048
        $region40: #{tpu_custom_call.1} parent=31 // pred_fallthru
          _
        // Predicated region
        $region41: #{tpu_custom_call.1} parent=31 // pred_check
          %p313 = pneg %p108
        $region42: #{tpu_custom_call.1} parent=31 // pred_check_branch
          %315 = sbr.rel (%p313) target = $region44
        $region43: #{tpu_custom_call.1} parent=31 // pred_region
          %317 = dma.done [#allocation6], 2048
        $region44: #{tpu_custom_call.1} parent=31 // pred_fallthru
          _
        %s318 = sand.u32 %s53, 1
        %s319 = scalar_lea.sflag [#allocation3], %s318
        %s320 = sand.u32 %s53, 1
        %s321 = smul.addr %s320, 256
        %s322 = scalar_lea.vmem [#allocation2], %s321
        %p323 = pneg %p66
        %p324 = pneg %p63
        %p325 = pneg %p87
        %p326 = pneg %p84
        %p327 = pneg %p108
        %p328 = pneg %p105
        %p329 = pneg %p136
        %p330 = pneg %p133
        %s331 = sand.u32 %s123, 1
        %s332 = scalar_lea.sflag [#allocation4], %s331
        %s333 = sand.u32 %s123, 1
        %s334 = smul.addr %s333, 256
        %s335 = scalar_lea.vmem [#allocation8], %s334
        %p336 = pneg %p164
        %p337 = pneg %p161
        %s338 = sand.u32 %s31, 1
        %s339 = scalar_lea.sflag [#allocation10], %s338
        %s340 = sand.u32 %s151, 1
        %s341 = smul.addr %s340, 2
        %s342 = scalar_lea.vmem [#allocation9], %s341
        %p343 = pneg %p192
        %p344 = pneg %p189
        %s345 = sand.u32 %s31, 1
        %s346 = scalar_lea.sflag [#allocation10], %s345
        %s347 = sand.u32 %s179, 1
        %s348 = smul.addr %s347, 256
        %s349 = scalar_lea.vmem [#allocation11], %s348
        %p350 = pneg %p220
        %p351 = pneg %p217
        %s352 = sand.u32 %s207, 1
        %s353 = scalar_lea.sflag [#allocation13], %s352
        %s354 = sand.u32 %s207, 1
        %s355 = smul.addr %s354, 2
        %s356 = scalar_lea.vmem [#allocation12], %s355
        %s357 = smul.u32 32, %s36
        %s358 = smul.u32 32, %s36
        %s359 = sadd.s32 %s35, %s36
        %s360 = smul.u32 32, %s36
        %s361 = sadd.s32 %s35, %s36
        %v362 = vld [vmem:[%s302] sm:$0xff]
        %v363 = vld [vmem:[%s302 + $0x8] sm:$0xff]
        %v364 = vld [vmem:[%s302 + $0x10] sm:$0xff]
        %v365 = vld [vmem:[%s302 + $0x18] sm:$0xff]
        %v366 = vld [vmem:[%s302 + $0x20] sm:$0xff]
        %v367 = vld [vmem:[%s302 + $0x28] sm:$0xff]
        %v368 = vld [vmem:[%s302 + $0x30] sm:$0xff]
        %v369 = vld [vmem:[%s302 + $0x38] sm:$0xff]
        %v370 = vld [vmem:[%s302 + $0x40] sm:$0xff]
        %v371 = vld [vmem:[%s302 + $0x48] sm:$0xff]
        %v372 = vld [vmem:[%s302 + $0x50] sm:$0xff]
        %v373 = vld [vmem:[%s302 + $0x58] sm:$0xff]
        %v374 = vld [vmem:[%s302 + $0x60] sm:$0xff]
        %v375 = vld [vmem:[%s302 + $0x68] sm:$0xff]
        %v376 = vld [vmem:[%s302 + $0x70] sm:$0xff]
        %v377 = vld [vmem:[%s302 + $0x78] sm:$0xff]
        %v378 = vld [vmem:[%s302 + $0x80] sm:$0xff]
        %v379 = vld [vmem:[%s302 + $0x88] sm:$0xff]
        %v380 = vld [vmem:[%s302 + $0x90] sm:$0xff]
        %v381 = vld [vmem:[%s302 + $0x98] sm:$0xff]
        %v382 = vld [vmem:[%s302 + $0xa0] sm:$0xff]
        %v383 = vld [vmem:[%s302 + $0xa8] sm:$0xff]
        %v384 = vld [vmem:[%s302 + $0xb0] sm:$0xff]
        %v385 = vld [vmem:[%s302 + $0xb8] sm:$0xff]
        %v386 = vld [vmem:[%s302 + $0xc0] sm:$0xff]
        %v387 = vld [vmem:[%s302 + $0xc8] sm:$0xff]
        %v388 = vld [vmem:[%s302 + $0xd0] sm:$0xff]
        %v389 = vld [vmem:[%s302 + $0xd8] sm:$0xff]
        %v390 = vld [vmem:[%s302 + $0xe0] sm:$0xff]
        %v391 = vld [vmem:[%s302 + $0xe8] sm:$0xff]
        %v392 = vld [vmem:[%s302 + $0xf0] sm:$0xff]
        %v393 = vld [vmem:[%s302 + $0xf8] sm:$0xff]
        %v394 = vld [vmem:[#allocation5] sm:$0xff]
        %v395 = vld [vmem:[#allocation5 + $0x8] sm:$0xff]
        %v396 = vld [vmem:[#allocation5 + $0x10] sm:$0xff]
        %v397 = vld [vmem:[#allocation5 + $0x18] sm:$0xff]
        %v398 = vld [vmem:[#allocation5 + $0x20] sm:$0xff]
        %v399 = vld [vmem:[#allocation5 + $0x28] sm:$0xff]
        %v400 = vld [vmem:[#allocation5 + $0x30] sm:$0xff]
        %v401 = vld [vmem:[#allocation5 + $0x38] sm:$0xff]
        %v402 = vld [vmem:[#allocation5 + $0x40] sm:$0xff]
        %v403 = vld [vmem:[#allocation5 + $0x48] sm:$0xff]
        %v404 = vld [vmem:[#allocation5 + $0x50] sm:$0xff]
        %v405 = vld [vmem:[#allocation5 + $0x58] sm:$0xff]
        %v406 = vld [vmem:[#allocation5 + $0x60] sm:$0xff]
        %v407 = vld [vmem:[#allocation5 + $0x68] sm:$0xff]
        %v408 = vld [vmem:[#allocation5 + $0x70] sm:$0xff]
        %v409 = vld [vmem:[#allocation5 + $0x78] sm:$0xff]
        %410 = vmatpush.msra.mxu0 %v409
        %411 = vmatpush.msra.mxu0 %v408
        %412 = vmatpush.msra.mxu0 %v407
        %413 = vmatpush.msra.mxu0 %v406
        %414 = vmatpush.msra.mxu0 %v405
        %415 = vmatpush.msra.mxu0 %v404
        %416 = vmatpush.msra.mxu0 %v403
        %417 = vmatpush.msra.mxu0 %v402
        %418 = vmatpush.msra.mxu0 %v401
        %419 = vmatpush.msra.mxu0 %v400
        %420 = vmatpush.msra.mxu0 %v399
        %421 = vmatpush.msra.mxu0 %v398
        %422 = vmatpush.msra.mxu0 %v397
        %423 = vmatpush.msra.mxu0 %v396
        %424 = vmatpush.msra.mxu0 %v395
        %425 = vmatpush.msra.mxu0 %v394
        %426 = vmatmul.f32.gmra.mxu0 %v362
        %v427 = vpop.f32.mrf.mxu0
        %v428 = vadd.f32 0.0, %v427
        %429 = vmatmul.f32.gmra.mxu0 %v363
        %v430 = vpop.f32.mrf.mxu0
        %v431 = vadd.f32 0.0, %v430
        %432 = vmatmul.f32.gmra.mxu0 %v364
        %v433 = vpop.f32.mrf.mxu0
        %v434 = vadd.f32 0.0, %v433
        %435 = vmatmul.f32.gmra.mxu0 %v365
        %v436 = vpop.f32.mrf.mxu0
        %v437 = vadd.f32 0.0, %v436
        %438 = vmatmul.f32.gmra.mxu0 %v366
        %v439 = vpop.f32.mrf.mxu0
        %v440 = vadd.f32 0.0, %v439
        %441 = vmatmul.f32.gmra.mxu0 %v367
        %v442 = vpop.f32.mrf.mxu0
        %v443 = vadd.f32 0.0, %v442
        %444 = vmatmul.f32.gmra.mxu0 %v368
        %v445 = vpop.f32.mrf.mxu0
        %v446 = vadd.f32 0.0, %v445
        %447 = vmatmul.f32.gmra.mxu0 %v369
        %v448 = vpop.f32.mrf.mxu0
        %v449 = vadd.f32 0.0, %v448
        %450 = vmatmul.f32.gmra.mxu0 %v370
        %v451 = vpop.f32.mrf.mxu0
        %v452 = vadd.f32 0.0, %v451
        %453 = vmatmul.f32.gmra.mxu0 %v371
        %v454 = vpop.f32.mrf.mxu0
        %v455 = vadd.f32 0.0, %v454
        %456 = vmatmul.f32.gmra.mxu0 %v372
        %v457 = vpop.f32.mrf.mxu0
        %v458 = vadd.f32 0.0, %v457
        %459 = vmatmul.f32.gmra.mxu0 %v373
        %v460 = vpop.f32.mrf.mxu0
        %v461 = vadd.f32 0.0, %v460
        %462 = vmatmul.f32.gmra.mxu0 %v374
        %v463 = vpop.f32.mrf.mxu0
        %v464 = vadd.f32 0.0, %v463
        %465 = vmatmul.f32.gmra.mxu0 %v375
        %v466 = vpop.f32.mrf.mxu0
        %v467 = vadd.f32 0.0, %v466
        %468 = vmatmul.f32.gmra.mxu0 %v376
        %v469 = vpop.f32.mrf.mxu0
        %v470 = vadd.f32 0.0, %v469
        %471 = vmatmul.f32.gmra.mxu0 %v377
        %v472 = vpop.f32.mrf.mxu0
        %v473 = vadd.f32 0.0, %v472
        %474 = vmatmul.f32.gmra.mxu0 %v378
        %v475 = vpop.f32.mrf.mxu0
        %v476 = vadd.f32 0.0, %v475
        %477 = vmatmul.f32.gmra.mxu0 %v379
        %v478 = vpop.f32.mrf.mxu0
        %v479 = vadd.f32 0.0, %v478
        %480 = vmatmul.f32.gmra.mxu0 %v380
        %v481 = vpop.f32.mrf.mxu0
        %v482 = vadd.f32 0.0, %v481
        %483 = vmatmul.f32.gmra.mxu0 %v381
        %v484 = vpop.f32.mrf.mxu0
        %v485 = vadd.f32 0.0, %v484
        %486 = vmatmul.f32.gmra.mxu0 %v382
        %v487 = vpop.f32.mrf.mxu0
        %v488 = vadd.f32 0.0, %v487
        %489 = vmatmul.f32.gmra.mxu0 %v383
        %v490 = vpop.f32.mrf.mxu0
        %v491 = vadd.f32 0.0, %v490
        %492 = vmatmul.f32.gmra.mxu0 %v384
        %v493 = vpop.f32.mrf.mxu0
        %v494 = vadd.f32 0.0, %v493
        %495 = vmatmul.f32.gmra.mxu0 %v385
        %v496 = vpop.f32.mrf.mxu0
        %v497 = vadd.f32 0.0, %v496
        %498 = vmatmul.f32.gmra.mxu0 %v386
        %v499 = vpop.f32.mrf.mxu0
        %v500 = vadd.f32 0.0, %v499
        %501 = vmatmul.f32.gmra.mxu0 %v387
        %v502 = vpop.f32.mrf.mxu0
        %v503 = vadd.f32 0.0, %v502
        %504 = vmatmul.f32.gmra.mxu0 %v388
        %v505 = vpop.f32.mrf.mxu0
        %v506 = vadd.f32 0.0, %v505
        %507 = vmatmul.f32.gmra.mxu0 %v389
        %v508 = vpop.f32.mrf.mxu0
        %v509 = vadd.f32 0.0, %v508
        %510 = vmatmul.f32.gmra.mxu0 %v390
        %v511 = vpop.f32.mrf.mxu0
        %v512 = vadd.f32 0.0, %v511
        %513 = vmatmul.f32.gmra.mxu0 %v391
        %v514 = vpop.f32.mrf.mxu0
        %v515 = vadd.f32 0.0, %v514
        %516 = vmatmul.f32.gmra.mxu0 %v392
        %v517 = vpop.f32.mrf.mxu0
        %v518 = vadd.f32 0.0, %v517
        %519 = vmatmul.f32.gmra.mxu0 %v393
        %v520 = vpop.f32.mrf.mxu0
        %v521 = vadd.f32 0.0, %v520
        %522 = vdwg.mxu0
        %523 = vst [vmem:[%s335] sm:$0xff] %v428
        %524 = vst [vmem:[%s335 + $0x8] sm:$0xff] %v431
        %525 = vst [vmem:[%s335 + $0x10] sm:$0xff] %v434
        %526 = vst [vmem:[%s335 + $0x18] sm:$0xff] %v437
        %527 = vst [vmem:[%s335 + $0x20] sm:$0xff] %v440
        %528 = vst [vmem:[%s335 + $0x28] sm:$0xff] %v443
        %529 = vst [vmem:[%s335 + $0x30] sm:$0xff] %v446
        %530 = vst [vmem:[%s335 + $0x38] sm:$0xff] %v449
        %531 = vst [vmem:[%s335 + $0x40] sm:$0xff] %v452
        %532 = vst [vmem:[%s335 + $0x48] sm:$0xff] %v455
        %533 = vst [vmem:[%s335 + $0x50] sm:$0xff] %v458
        %534 = vst [vmem:[%s335 + $0x58] sm:$0xff] %v461
        %535 = vst [vmem:[%s335 + $0x60] sm:$0xff] %v464
        %536 = vst [vmem:[%s335 + $0x68] sm:$0xff] %v467
        %537 = vst [vmem:[%s335 + $0x70] sm:$0xff] %v470
        %538 = vst [vmem:[%s335 + $0x78] sm:$0xff] %v473
        %539 = vst [vmem:[%s335 + $0x80] sm:$0xff] %v476
        %540 = vst [vmem:[%s335 + $0x88] sm:$0xff] %v479
        %541 = vst [vmem:[%s335 + $0x90] sm:$0xff] %v482
        %542 = vst [vmem:[%s335 + $0x98] sm:$0xff] %v485
        %543 = vst [vmem:[%s335 + $0xa0] sm:$0xff] %v488
        %544 = vst [vmem:[%s335 + $0xa8] sm:$0xff] %v491
        %545 = vst [vmem:[%s335 + $0xb0] sm:$0xff] %v494
        %546 = vst [vmem:[%s335 + $0xb8] sm:$0xff] %v497
        %547 = vst [vmem:[%s335 + $0xc0] sm:$0xff] %v500
        %548 = vst [vmem:[%s335 + $0xc8] sm:$0xff] %v503
        %549 = vst [vmem:[%s335 + $0xd0] sm:$0xff] %v506
        %550 = vst [vmem:[%s335 + $0xd8] sm:$0xff] %v509
        %551 = vst [vmem:[%s335 + $0xe0] sm:$0xff] %v512
        %552 = vst [vmem:[%s335 + $0xe8] sm:$0xff] %v515
        %553 = vst [vmem:[%s335 + $0xf0] sm:$0xff] %v518
        %554 = vst [vmem:[%s335 + $0xf8] sm:$0xff] %v521
        %v555 = vadd.f32 %v428, %v431
        %v556 = vadd.f32 %v555, %v434
        %v557 = vadd.f32 %v556, %v437
        %v558 = vadd.f32 %v557, %v440
        %v559 = vadd.f32 %v558, %v443
        %v560 = vadd.f32 %v559, %v446
        %v561 = vadd.f32 %v560, %v449
        %v562 = vadd.f32 %v561, %v452
        %v563 = vadd.f32 %v562, %v455
        %v564 = vadd.f32 %v563, %v458
        %v565 = vadd.f32 %v564, %v461
        %v566 = vadd.f32 %v565, %v464
        %v567 = vadd.f32 %v566, %v467
        %v568 = vadd.f32 %v567, %v470
        %v569 = vadd.f32 %v568, %v473
        %v570 = vadd.f32 %v569, %v476
        %v571 = vadd.f32 %v570, %v479
        %v572 = vadd.f32 %v571, %v482
        %v573 = vadd.f32 %v572, %v485
        %v574 = vadd.f32 %v573, %v488
        %v575 = vadd.f32 %v574, %v491
        %v576 = vadd.f32 %v575, %v494
        %v577 = vadd.f32 %v576, %v497
        %v578 = vadd.f32 %v577, %v500
        %v579 = vadd.f32 %v578, %v503
        %v580 = vadd.f32 %v579, %v506
        %v581 = vadd.f32 %v580, %v509
        %v582 = vadd.f32 %v581, %v512
        %v583 = vadd.f32 %v582, %v515
        %v584 = vadd.f32 %v583, %v518
        %v585 = vadd.f32 %v584, %v521
        %v586 = vrot.slane %v585, 4
        %v587 = vadd.f32 %v585, %v586
        %v588 = vrot.slane %v587, 2
        %v589 = vadd.f32 %v587, %v588
        %v590 = vrot.slane %v589, 1
        %v591 = vadd.f32 %v589, %v590
        %592 = vst [vmem:[%s342] sm:$0x1] %v591
        %v593 = vmul.f32 %v428, %v428
        %v594 = vmul.f32 %v431, %v431
        %v595 = vmul.f32 %v434, %v434
        %v596 = vmul.f32 %v437, %v437
        %v597 = vmul.f32 %v440, %v440
        %v598 = vmul.f32 %v443, %v443
        %v599 = vmul.f32 %v446, %v446
        %v600 = vmul.f32 %v449, %v449
        %v601 = vmul.f32 %v452, %v452
        %v602 = vmul.f32 %v455, %v455
        %v603 = vmul.f32 %v458, %v458
        %v604 = vmul.f32 %v461, %v461
        %v605 = vmul.f32 %v464, %v464
        %v606 = vmul.f32 %v467, %v467
        %v607 = vmul.f32 %v470, %v470
        %v608 = vmul.f32 %v473, %v473
        %v609 = vmul.f32 %v476, %v476
        %v610 = vmul.f32 %v479, %v479
        %v611 = vmul.f32 %v482, %v482
        %v612 = vmul.f32 %v485, %v485
        %v613 = vmul.f32 %v488, %v488
        %v614 = vmul.f32 %v491, %v491
        %v615 = vmul.f32 %v494, %v494
        %v616 = vmul.f32 %v497, %v497
        %v617 = vmul.f32 %v500, %v500
        %v618 = vmul.f32 %v503, %v503
        %v619 = vmul.f32 %v506, %v506
        %v620 = vmul.f32 %v509, %v509
        %v621 = vmul.f32 %v512, %v512
        %v622 = vmul.f32 %v515, %v515
        %v623 = vmul.f32 %v518, %v518
        %v624 = vmul.f32 %v521, %v521
        %v625 = vadd.f32 %v593, %v594
        %v626 = vadd.f32 %v625, %v595
        %v627 = vadd.f32 %v626, %v596
        %v628 = vadd.f32 %v627, %v597
        %v629 = vadd.f32 %v628, %v598
        %v630 = vadd.f32 %v629, %v599
        %v631 = vadd.f32 %v630, %v600
        %v632 = vadd.f32 %v631, %v601
        %v633 = vadd.f32 %v632, %v602
        %v634 = vadd.f32 %v633, %v603
        %v635 = vadd.f32 %v634, %v604
        %v636 = vadd.f32 %v635, %v605
        %v637 = vadd.f32 %v636, %v606
        %v638 = vadd.f32 %v637, %v607
        %v639 = vadd.f32 %v638, %v608
        %v640 = vadd.f32 %v639, %v609
        %v641 = vadd.f32 %v640, %v610
        %v642 = vadd.f32 %v641, %v611
        %v643 = vadd.f32 %v642, %v612
        %v644 = vadd.f32 %v643, %v613
        %v645 = vadd.f32 %v644, %v614
        %v646 = vadd.f32 %v645, %v615
        %v647 = vadd.f32 %v646, %v616
        %v648 = vadd.f32 %v647, %v617
        %v649 = vadd.f32 %v648, %v618
        %v650 = vadd.f32 %v649, %v619
        %v651 = vadd.f32 %v650, %v620
        %v652 = vadd.f32 %v651, %v621
        %v653 = vadd.f32 %v652, %v622
        %v654 = vadd.f32 %v653, %v623
        %v655 = vadd.f32 %v654, %v624
        %v656 = vrot.slane %v655, 4
        %v657 = vadd.f32 %v655, %v656
        %v658 = vrot.slane %v657, 2
        %v659 = vadd.f32 %v657, %v658
        %v660 = vrot.slane %v659, 1
        %v661 = vadd.f32 %v659, %v660
        %662 = vst [vmem:[%s342 + $0x1] sm:$0x1] %v661
        %v663 = vld [vmem:[#allocation7] sm:$0xff]
        %v664 = vld [vmem:[#allocation7 + $0x8] sm:$0xff]
        %v665 = vld [vmem:[#allocation7 + $0x10] sm:$0xff]
        %v666 = vld [vmem:[#allocation7 + $0x18] sm:$0xff]
        %v667 = vld [vmem:[#allocation7 + $0x20] sm:$0xff]
        %v668 = vld [vmem:[#allocation7 + $0x28] sm:$0xff]
        %v669 = vld [vmem:[#allocation7 + $0x30] sm:$0xff]
        %v670 = vld [vmem:[#allocation7 + $0x38] sm:$0xff]
        %v671 = vld [vmem:[#allocation7 + $0x40] sm:$0xff]
        %v672 = vld [vmem:[#allocation7 + $0x48] sm:$0xff]
        %v673 = vld [vmem:[#allocation7 + $0x50] sm:$0xff]
        %v674 = vld [vmem:[#allocation7 + $0x58] sm:$0xff]
        %v675 = vld [vmem:[#allocation7 + $0x60] sm:$0xff]
        %v676 = vld [vmem:[#allocation7 + $0x68] sm:$0xff]
        %v677 = vld [vmem:[#allocation7 + $0x70] sm:$0xff]
        %v678 = vld [vmem:[#allocation7 + $0x78] sm:$0xff]
        %679 = vmatpush.msra.mxu0 %v678
        %680 = vmatpush.msra.mxu0 %v677
        %681 = vmatpush.msra.mxu0 %v676
        %682 = vmatpush.msra.mxu0 %v675
        %683 = vmatpush.msra.mxu0 %v674
        %684 = vmatpush.msra.mxu0 %v673
        %685 = vmatpush.msra.mxu0 %v672
        %686 = vmatpush.msra.mxu0 %v671
        %687 = vmatpush.msra.mxu0 %v670
        %688 = vmatpush.msra.mxu0 %v669
        %689 = vmatpush.msra.mxu0 %v668
        %690 = vmatpush.msra.mxu0 %v667
        %691 = vmatpush.msra.mxu0 %v666
        %692 = vmatpush.msra.mxu0 %v665
        %693 = vmatpush.msra.mxu0 %v664
        %694 = vmatpush.msra.mxu0 %v663
        %695 = vmatmul.f32.gmra.mxu0 %v362
        %v696 = vpop.f32.mrf.mxu0
        %v697 = vadd.f32 0.0, %v696
        %698 = vmatmul.f32.gmra.mxu0 %v363
        %v699 = vpop.f32.mrf.mxu0
        %v700 = vadd.f32 0.0, %v699
        %701 = vmatmul.f32.gmra.mxu0 %v364
        %v702 = vpop.f32.mrf.mxu0
        %v703 = vadd.f32 0.0, %v702
        %704 = vmatmul.f32.gmra.mxu0 %v365
        %v705 = vpop.f32.mrf.mxu0
        %v706 = vadd.f32 0.0, %v705
        %707 = vmatmul.f32.gmra.mxu0 %v366
        %v708 = vpop.f32.mrf.mxu0
        %v709 = vadd.f32 0.0, %v708
        %710 = vmatmul.f32.gmra.mxu0 %v367
        %v711 = vpop.f32.mrf.mxu0
        %v712 = vadd.f32 0.0, %v711
        %713 = vmatmul.f32.gmra.mxu0 %v368
        %v714 = vpop.f32.mrf.mxu0
        %v715 = vadd.f32 0.0, %v714
        %716 = vmatmul.f32.gmra.mxu0 %v369
        %v717 = vpop.f32.mrf.mxu0
        %v718 = vadd.f32 0.0, %v717
        %719 = vmatmul.f32.gmra.mxu0 %v370
        %v720 = vpop.f32.mrf.mxu0
        %v721 = vadd.f32 0.0, %v720
        %722 = vmatmul.f32.gmra.mxu0 %v371
        %v723 = vpop.f32.mrf.mxu0
        %v724 = vadd.f32 0.0, %v723
        %725 = vmatmul.f32.gmra.mxu0 %v372
        %v726 = vpop.f32.mrf.mxu0
        %v727 = vadd.f32 0.0, %v726
        %728 = vmatmul.f32.gmra.mxu0 %v373
        %v729 = vpop.f32.mrf.mxu0
        %v730 = vadd.f32 0.0, %v729
        %731 = vmatmul.f32.gmra.mxu0 %v374
        %v732 = vpop.f32.mrf.mxu0
        %v733 = vadd.f32 0.0, %v732
        %734 = vmatmul.f32.gmra.mxu0 %v375
        %v735 = vpop.f32.mrf.mxu0
        %v736 = vadd.f32 0.0, %v735
        %737 = vmatmul.f32.gmra.mxu0 %v376
        %v738 = vpop.f32.mrf.mxu0
        %v739 = vadd.f32 0.0, %v738
        %740 = vmatmul.f32.gmra.mxu0 %v377
        %v741 = vpop.f32.mrf.mxu0
        %v742 = vadd.f32 0.0, %v741
        %743 = vmatmul.f32.gmra.mxu0 %v378
        %v744 = vpop.f32.mrf.mxu0
        %v745 = vadd.f32 0.0, %v744
        %746 = vmatmul.f32.gmra.mxu0 %v379
        %v747 = vpop.f32.mrf.mxu0
        %v748 = vadd.f32 0.0, %v747
        %749 = vmatmul.f32.gmra.mxu0 %v380
        %v750 = vpop.f32.mrf.mxu0
        %v751 = vadd.f32 0.0, %v750
        %752 = vmatmul.f32.gmra.mxu0 %v381
        %v753 = vpop.f32.mrf.mxu0
        %v754 = vadd.f32 0.0, %v753
        %755 = vmatmul.f32.gmra.mxu0 %v382
        %v756 = vpop.f32.mrf.mxu0
        %v757 = vadd.f32 0.0, %v756
        %758 = vmatmul.f32.gmra.mxu0 %v383
        %v759 = vpop.f32.mrf.mxu0
        %v760 = vadd.f32 0.0, %v759
        %761 = vmatmul.f32.gmra.mxu0 %v384
        %v762 = vpop.f32.mrf.mxu0
        %v763 = vadd.f32 0.0, %v762
        %764 = vmatmul.f32.gmra.mxu0 %v385
        %v765 = vpop.f32.mrf.mxu0
        %v766 = vadd.f32 0.0, %v765
        %767 = vmatmul.f32.gmra.mxu0 %v386
        %v768 = vpop.f32.mrf.mxu0
        %v769 = vadd.f32 0.0, %v768
        %770 = vmatmul.f32.gmra.mxu0 %v387
        %v771 = vpop.f32.mrf.mxu0
        %v772 = vadd.f32 0.0, %v771
        %773 = vmatmul.f32.gmra.mxu0 %v388
        %v774 = vpop.f32.mrf.mxu0
        %v775 = vadd.f32 0.0, %v774
        %776 = vmatmul.f32.gmra.mxu0 %v389
        %v777 = vpop.f32.mrf.mxu0
        %v778 = vadd.f32 0.0, %v777
        %779 = vmatmul.f32.gmra.mxu0 %v390
        %v780 = vpop.f32.mrf.mxu0
        %v781 = vadd.f32 0.0, %v780
        %782 = vmatmul.f32.gmra.mxu0 %v391
        %v783 = vpop.f32.mrf.mxu0
        %v784 = vadd.f32 0.0, %v783
        %785 = vmatmul.f32.gmra.mxu0 %v392
        %v786 = vpop.f32.mrf.mxu0
        %v787 = vadd.f32 0.0, %v786
        %788 = vmatmul.f32.gmra.mxu0 %v393
        %v789 = vpop.f32.mrf.mxu0
        %v790 = vadd.f32 0.0, %v789
        %791 = vdwg.mxu0
        %792 = vst [vmem:[%s349] sm:$0xff] %v697
        %793 = vst [vmem:[%s349 + $0x8] sm:$0xff] %v700
        %794 = vst [vmem:[%s349 + $0x10] sm:$0xff] %v703
        %795 = vst [vmem:[%s349 + $0x18] sm:$0xff] %v706
        %796 = vst [vmem:[%s349 + $0x20] sm:$0xff] %v709
        %797 = vst [vmem:[%s349 + $0x28] sm:$0xff] %v712
        %798 = vst [vmem:[%s349 + $0x30] sm:$0xff] %v715
        %799 = vst [vmem:[%s349 + $0x38] sm:$0xff] %v718
        %800 = vst [vmem:[%s349 + $0x40] sm:$0xff] %v721
        %801 = vst [vmem:[%s349 + $0x48] sm:$0xff] %v724
        %802 = vst [vmem:[%s349 + $0x50] sm:$0xff] %v727
        %803 = vst [vmem:[%s349 + $0x58] sm:$0xff] %v730
        %804 = vst [vmem:[%s349 + $0x60] sm:$0xff] %v733
        %805 = vst [vmem:[%s349 + $0x68] sm:$0xff] %v736
        %806 = vst [vmem:[%s349 + $0x70] sm:$0xff] %v739
        %807 = vst [vmem:[%s349 + $0x78] sm:$0xff] %v742
        %808 = vst [vmem:[%s349 + $0x80] sm:$0xff] %v745
        %809 = vst [vmem:[%s349 + $0x88] sm:$0xff] %v748
        %810 = vst [vmem:[%s349 + $0x90] sm:$0xff] %v751
        %811 = vst [vmem:[%s349 + $0x98] sm:$0xff] %v754
        %812 = vst [vmem:[%s349 + $0xa0] sm:$0xff] %v757
        %813 = vst [vmem:[%s349 + $0xa8] sm:$0xff] %v760
        %814 = vst [vmem:[%s349 + $0xb0] sm:$0xff] %v763
        %815 = vst [vmem:[%s349 + $0xb8] sm:$0xff] %v766
        %816 = vst [vmem:[%s349 + $0xc0] sm:$0xff] %v769
        %817 = vst [vmem:[%s349 + $0xc8] sm:$0xff] %v772
        %818 = vst [vmem:[%s349 + $0xd0] sm:$0xff] %v775
        %819 = vst [vmem:[%s349 + $0xd8] sm:$0xff] %v778
        %820 = vst [vmem:[%s349 + $0xe0] sm:$0xff] %v781
        %821 = vst [vmem:[%s349 + $0xe8] sm:$0xff] %v784
        %822 = vst [vmem:[%s349 + $0xf0] sm:$0xff] %v787
        %823 = vst [vmem:[%s349 + $0xf8] sm:$0xff] %v790
        %v824 = vadd.f32 %v697, %v700
        %v825 = vadd.f32 %v824, %v703
        %v826 = vadd.f32 %v825, %v706
        %v827 = vadd.f32 %v826, %v709
        %v828 = vadd.f32 %v827, %v712
        %v829 = vadd.f32 %v828, %v715
        %v830 = vadd.f32 %v829, %v718
        %v831 = vadd.f32 %v830, %v721
        %v832 = vadd.f32 %v831, %v724
        %v833 = vadd.f32 %v832, %v727
        %v834 = vadd.f32 %v833, %v730
        %v835 = vadd.f32 %v834, %v733
        %v836 = vadd.f32 %v835, %v736
        %v837 = vadd.f32 %v836, %v739
        %v838 = vadd.f32 %v837, %v742
        %v839 = vadd.f32 %v838, %v745
        %v840 = vadd.f32 %v839, %v748
        %v841 = vadd.f32 %v840, %v751
        %v842 = vadd.f32 %v841, %v754
        %v843 = vadd.f32 %v842, %v757
        %v844 = vadd.f32 %v843, %v760
        %v845 = vadd.f32 %v844, %v763
        %v846 = vadd.f32 %v845, %v766
        %v847 = vadd.f32 %v846, %v769
        %v848 = vadd.f32 %v847, %v772
        %v849 = vadd.f32 %v848, %v775
        %v850 = vadd.f32 %v849, %v778
        %v851 = vadd.f32 %v850, %v781
        %v852 = vadd.f32 %v851, %v784
        %v853 = vadd.f32 %v852, %v787
        %v854 = vadd.f32 %v853, %v790
        %v855 = vrot.slane %v854, 4
        %v856 = vadd.f32 %v854, %v855
        %v857 = vrot.slane %v856, 2
        %v858 = vadd.f32 %v856, %v857
        %v859 = vrot.slane %v858, 1
        %v860 = vadd.f32 %v858, %v859
        %861 = vst [vmem:[%s356] sm:$0x1] %v860
        %v862 = vmul.f32 %v697, %v697
        %v863 = vmul.f32 %v700, %v700
        %v864 = vmul.f32 %v703, %v703
        %v865 = vmul.f32 %v706, %v706
        %v866 = vmul.f32 %v709, %v709
        %v867 = vmul.f32 %v712, %v712
        %v868 = vmul.f32 %v715, %v715
        %v869 = vmul.f32 %v718, %v718
        %v870 = vmul.f32 %v721, %v721
        %v871 = vmul.f32 %v724, %v724
        %v872 = vmul.f32 %v727, %v727
        %v873 = vmul.f32 %v730, %v730
        %v874 = vmul.f32 %v733, %v733
        %v875 = vmul.f32 %v736, %v736
        %v876 = vmul.f32 %v739, %v739
        %v877 = vmul.f32 %v742, %v742
        %v878 = vmul.f32 %v745, %v745
        %v879 = vmul.f32 %v748, %v748
        %v880 = vmul.f32 %v751, %v751
        %v881 = vmul.f32 %v754, %v754
        %v882 = vmul.f32 %v757, %v757
        %v883 = vmul.f32 %v760, %v760
        %v884 = vmul.f32 %v763, %v763
        %v885 = vmul.f32 %v766, %v766
        %v886 = vmul.f32 %v769, %v769
        %v887 = vmul.f32 %v772, %v772
        %v888 = vmul.f32 %v775, %v775
        %v889 = vmul.f32 %v778, %v778
        %v890 = vmul.f32 %v781, %v781
        %v891 = vmul.f32 %v784, %v784
        %v892 = vmul.f32 %v787, %v787
        %v893 = vmul.f32 %v790, %v790
        %v894 = vadd.f32 %v862, %v863
        %v895 = vadd.f32 %v894, %v864
        %v896 = vadd.f32 %v895, %v865
        %v897 = vadd.f32 %v896, %v866
        %v898 = vadd.f32 %v897, %v867
        %v899 = vadd.f32 %v898, %v868
        %v900 = vadd.f32 %v899, %v869
        %v901 = vadd.f32 %v900, %v870
        %v902 = vadd.f32 %v901, %v871
        %v903 = vadd.f32 %v902, %v872
        %v904 = vadd.f32 %v903, %v873
        %v905 = vadd.f32 %v904, %v874
        %v906 = vadd.f32 %v905, %v875
        %v907 = vadd.f32 %v906, %v876
        %v908 = vadd.f32 %v907, %v877
        %v909 = vadd.f32 %v908, %v878
        %v910 = vadd.f32 %v909, %v879
        %v911 = vadd.f32 %v910, %v880
        %v912 = vadd.f32 %v911, %v881
        %v913 = vadd.f32 %v912, %v882
        %v914 = vadd.f32 %v913, %v883
        %v915 = vadd.f32 %v914, %v884
        %v916 = vadd.f32 %v915, %v885
        %v917 = vadd.f32 %v916, %v886
        %v918 = vadd.f32 %v917, %v887
        %v919 = vadd.f32 %v918, %v888
        %v920 = vadd.f32 %v919, %v889
        %v921 = vadd.f32 %v920, %v890
        %v922 = vadd.f32 %v921, %v891
        %v923 = vadd.f32 %v922, %v892
        %v924 = vadd.f32 %v923, %v893
        %v925 = vrot.slane %v924, 4
        %v926 = vadd.f32 %v924, %v925
        %v927 = vrot.slane %v926, 2
        %v928 = vadd.f32 %v926, %v927
        %v929 = vrot.slane %v928, 1
        %v930 = vadd.f32 %v928, %v929
        %931 = vst [vmem:[%s356 + $0x1] sm:$0x1] %v930
        %s932 = sand.u32 %s123, 1
        %s933 = scalar_lea.sflag [#allocation4], %s932
        %s934 = sand.u32 %s123, 1
        %s935 = smul.addr %s934, 256
        %s936 = scalar_lea.vmem [#allocation8], %s935
        %s937 = sand.u32 %s31, 1
        %s938 = scalar_lea.sflag [#allocation10], %s937
        %s939 = sand.u32 %s151, 1
        %s940 = smul.addr %s939, 2
        %s941 = scalar_lea.vmem [#allocation9], %s940
        %s942 = sand.u32 %s31, 1
        %s943 = scalar_lea.sflag [#allocation10], %s942
        %s944 = sand.u32 %s179, 1
        %s945 = smul.addr %s944, 256
        %s946 = scalar_lea.vmem [#allocation11], %s945
        %s947 = sand.u32 %s207, 1
        %s948 = scalar_lea.sflag [#allocation13], %s947
        %s949 = sand.u32 %s207, 1
        %s950 = smul.addr %s949, 2
        %s951 = scalar_lea.vmem [#allocation12], %s950
        // Predicated region
        $region45: #{tpu_custom_call.1} parent=31 // pred_check
          %p952 = pneg %p133
        $region46: #{tpu_custom_call.1} parent=31 // pred_check_branch
          %954 = sbr.rel (%p952) target = $region48
        $region47: #{tpu_custom_call.1} parent=31 // pred_region
          %s955 = smul.u32 32, %s36
          %957 = vsyncadd %s933, 0
          %s958 = smul.addr %s35, 32
          %s959 = sadd.s32 %s955, %s958
          %s960 = smul.addr %s959, 8
          %s961 = scalar_lea.hbm %s3, %s960
          %s962 = sshll.u32 %s936, 4
          %s963 = int_to_ptr.vmem [resolvable:$true] %s962
          %s964 = sshll.u32 %s961, 4
          %s965 = int_to_ptr.hbm [resolvable:$true] %s964
          %970 = dma.vmem_to_hbm [thread:$0]  %s963, 4096, %s965, %s933, 128, 128, 8
        $region48: #{tpu_custom_call.1} parent=31 // pred_fallthru
          _
        // Predicated region
        $region49: #{tpu_custom_call.1} parent=31 // pred_check
          %p971 = pneg %p161
        $region50: #{tpu_custom_call.1} parent=31 // pred_check_branch
          %973 = sbr.rel (%p971) target = $region52
        $region51: #{tpu_custom_call.1} parent=31 // pred_region
          %s974 = sadd.s32 %s35, %s36
          %976 = vsyncadd %s938, 0
          %s977 = smul.addr %s974, 2
          %s978 = scalar_lea.hbm %s4, %s977
          %s980 = sshll.u32 %s941, 4
          %s981 = int_to_ptr.vmem [resolvable:$true] %s980
          %s982 = sshll.u32 %s978, 4
          %s983 = int_to_ptr.hbm [resolvable:$true] %s982
          %985 = dma.vmem_to_hbm [thread:$0]  %s981, 32, %s983, %s938
        $region52: #{tpu_custom_call.1} parent=31 // pred_fallthru
          _
        // Predicated region
        $region53: #{tpu_custom_call.1} parent=31 // pred_check
          %p986 = pneg %p189
        $region54: #{tpu_custom_call.1} parent=31 // pred_check_branch
          %988 = sbr.rel (%p986) target = $region56
        $region55: #{tpu_custom_call.1} parent=31 // pred_region
          %s989 = smul.u32 32, %s36
          %991 = vsyncadd %s943, 0
          %s992 = smul.addr %s35, 32
          %s993 = sadd.s32 %s989, %s992
          %s994 = smul.addr %s993, 8
          %s995 = scalar_lea.hbm %s5, %s994
          %s996 = sshll.u32 %s946, 4
          %s997 = int_to_ptr.vmem [resolvable:$true] %s996
          %s998 = sshll.u32 %s995, 4
          %s999 = int_to_ptr.hbm [resolvable:$true] %s998
          %1004 = dma.vmem_to_hbm [thread:$0]  %s997, 4096, %s999, %s943, 128, 128, 8
        $region56: #{tpu_custom_call.1} parent=31 // pred_fallthru
          _
        // Predicated region
        $region57: #{tpu_custom_call.1} parent=31 // pred_check
          %p1005 = pneg %p217
        $region58: #{tpu_custom_call.1} parent=31 // pred_check_branch
          %1007 = sbr.rel (%p1005) target = $region60
        $region59: #{tpu_custom_call.1} parent=31 // pred_region
          %s1008 = sadd.s32 %s35, %s36
          %1010 = vsyncadd %s948, 0
          %s1011 = smul.addr %s1008, 2
          %s1012 = scalar_lea.hbm %s6, %s1011
          %s1014 = sshll.u32 %s951, 4
          %s1015 = int_to_ptr.vmem [resolvable:$true] %s1014
          %s1016 = sshll.u32 %s1012, 4
          %s1017 = int_to_ptr.hbm [resolvable:$true] %s1016
          %1019 = dma.vmem_to_hbm [thread:$0]  %s1015, 32, %s1017, %s948
        $region60: #{tpu_custom_call.1} parent=31 // pred_fallthru
          _
      $region32: #{tpu_custom_call.1} parent=5 // pred_fallthru
        _
      %p1020 = scmp.le.s32.totalorder 2, %s26
      // Predicated region
      $region61: #{tpu_custom_call.1} parent=5 // pred_check
        %p1021 = pneg %p1020
      $region62: #{tpu_custom_call.1} parent=5 // pred_check_branch
        %1023 = sbr.rel (%p1021) target = $region64
      $region63: #{tpu_custom_call.1} parent=5 // pred_region
        %s1024 = ssub.s32 %s26, 2
        // Predicated region
        $region65: #{tpu_custom_call.1} parent=63 // pred_check
          %p1025 = pneg %p139
        $region66: #{tpu_custom_call.1} parent=63 // pred_check_branch
          %1027 = sbr.rel (%p1025) target = $region68
        $region67: #{tpu_custom_call.1} parent=63 // pred_region
          %s1028 = sand.u32 %s124, 1
          %s1029 = scalar_lea.sflag [#allocation4], %s1028
          %s1030 = sand.u32 %s124, 1
          %s1031 = smul.addr %s1030, 256
          %s1032 = scalar_lea.vmem [#allocation8], %s1031
          %1034 = dma.done %s1029, 4096
        $region68: #{tpu_custom_call.1} parent=63 // pred_fallthru
          _
        // Predicated region
        $region69: #{tpu_custom_call.1} parent=63 // pred_check
          %p1035 = pneg %p167
        $region70: #{tpu_custom_call.1} parent=63 // pred_check_branch
          %1037 = sbr.rel (%p1035) target = $region72
        $region71: #{tpu_custom_call.1} parent=63 // pred_region
          %s1038 = sand.u32 %s32, 1
          %s1039 = scalar_lea.sflag [#allocation10], %s1038
          %s1040 = sand.u32 %s152, 1
          %s1041 = smul.addr %s1040, 2
          %s1042 = scalar_lea.vmem [#allocation9], %s1041
          %1044 = dma.done %s1039, 32
        $region72: #{tpu_custom_call.1} parent=63 // pred_fallthru
          _
        // Predicated region
        $region73: #{tpu_custom_call.1} parent=63 // pred_check
          %p1045 = pneg %p195
        $region74: #{tpu_custom_call.1} parent=63 // pred_check_branch
          %1047 = sbr.rel (%p1045) target = $region76
        $region75: #{tpu_custom_call.1} parent=63 // pred_region
          %s1048 = sand.u32 %s32, 1
          %s1049 = scalar_lea.sflag [#allocation10], %s1048
          %s1050 = sand.u32 %s180, 1
          %s1051 = smul.addr %s1050, 256
          %s1052 = scalar_lea.vmem [#allocation11], %s1051
          %1054 = dma.done %s1049, 4096
        $region76: #{tpu_custom_call.1} parent=63 // pred_fallthru
          _
        // Predicated region
        $region77: #{tpu_custom_call.1} parent=63 // pred_check
          %p1055 = pneg %p223
        $region78: #{tpu_custom_call.1} parent=63 // pred_check_branch
          %1057 = sbr.rel (%p1055) target = $region80
        $region79: #{tpu_custom_call.1} parent=63 // pred_region
          %s1058 = sand.u32 %s208, 1
          %s1059 = scalar_lea.sflag [#allocation13], %s1058
          %s1060 = sand.u32 %s208, 1
          %s1061 = smul.addr %s1060, 2
          %s1062 = scalar_lea.vmem [#allocation12], %s1061
          %1064 = dma.done %s1059, 32
        $region80: #{tpu_custom_call.1} parent=63 // pred_fallthru
          _
      $region64: #{tpu_custom_call.1} parent=5 // pred_fallthru
        _
    $region6: #{tpu_custom_call.1} parent=1 // loop_footer
      %s30 = sadd.s32 1, %s26
    $region7: #{tpu_custom_call.1} parent=1 // loop_footer_branch
      %25 = sbr.rel target = $region3
    $region8: #{tpu_custom_call.1} parent=1 // loop_exit
      _
    %1065 = vsyncpa [#allocation3], 1
    %s1066 = scalar_lea.sflag [#allocation3], 1
    %1067 = vsyncpa %s1066, 1
    %1068 = vsyncpa [#allocation6], 1
    %1069 = vsyncpa [#allocation4], 1
    %s1070 = scalar_lea.sflag [#allocation4], 1
    %1071 = vsyncpa %s1070, 1
    %1072 = vsyncpa [#allocation10], 1
    %s1073 = scalar_lea.sflag [#allocation10], 1
    %1074 = vsyncpa %s1073, 1
    %1075 = vsyncpa [#allocation13], 1
    %s1076 = scalar_lea.sflag [#allocation13], 1
    %1077 = vsyncpa %s1076, 1

</llo_original>
